<compile_context>
chip_gen: v7x
topology: tpu7x:2x2x1
jax: 0.10.0
libtpu: 0.0.40
codegen_flags: <defaults>
</compile_context>

<pallas_src>
import functools

import jax
import jax.numpy as jnp
from jax.experimental import pallas as pl
from jax.experimental.pallas import tpu as pltpu


def _teacher_kernel(relu_outputs, img_ref, wx_ref, wh_ref, bias_ref, out_ref):
    """Whole TeacherImageModel hot path on one VMEM-resident tile.

    img:  (B, S, L) f32   — CLS token taken in-kernel
    wx:   (L, H+L+C) bf16 — [w1 | wp | wp@wc2]
    wh:   (H, H+C)   bf16 — [w2 | wc1]
    bias: (2, H+L+C) f32  — row0 = [b1 | 0 | bc2], row1 = [b2 | bc1 | 0]
    out:  (B, L+256) f32  — [proj | out1,pad128 | out2,pad128]
    """
    H, HC = wh_ref.shape
    C = HC - H
    L = img_ref.shape[2]
    B = img_ref.shape[0]

    # CLS-token select inside the kernel; MXU inputs narrowed to bf16.
    x = img_ref[...][:, 0, :].astype(jnp.bfloat16)          # (B, L)

    # Fused x-stage: one MXU issue produces h1(pre-ReLU), proj and out2.
    bx = bias_ref[0:1, :]                                    # (1, H+L+C) f32
    y = jnp.dot(x, wx_ref[...], preferred_element_type=jnp.float32) + bx

    h = jnp.maximum(y[:, :H], 0.0).astype(jnp.bfloat16)      # relu(h1)
    proj = y[:, H:H + L]                                     # x @ wp
    out2 = y[:, H + L:H + L + C]                             # proj @ wc2 + bc2 (folded)

    # h-chain (data-dependent, cannot be fused further): bias/ReLU stay f32.
    b2 = bias_ref[1:2, :H]
    bc1 = bias_ref[1:2, H:H + C]
    h = jnp.dot(h, wh_ref[:, :H], preferred_element_type=jnp.float32) + b2
    h = jnp.maximum(h, 0.0).astype(jnp.bfloat16)
    out1 = jnp.dot(h, wh_ref[:, H:], preferred_element_type=jnp.float32) + bc1

    if relu_outputs:  # task_name == 'sts-b' branch (static Python flag)
        out1 = jnp.maximum(out1, 0.0)
        out2 = jnp.maximum(out2, 0.0)

    # One lane-dense, fully initialized writeback slab -> single unmasked store.
    pad = jnp.zeros((B, 128 - C), jnp.float32)
    out_ref[...] = jnp.concatenate([proj, out1, pad, out2, pad], axis=-1)


@functools.partial(jax.jit, static_argnames="task_name")
def teacher_image_model_forward(image, params, task_name="classification"):
    """image: (B, S, latent) f32. Returns (out1, out2, proj) like the PyTorch forward."""
    B, _, L = image.shape
    wx, wh, bias = params["wx"], params["wh"], params["bias"]
    H = wh.shape[0]
    C = wh.shape[1] - H

    vmem = pl.BlockSpec(memory_space=pltpu.MemorySpace.VMEM)
    kernel = functools.partial(_teacher_kernel, task_name == "sts-b")

    flops = 2 * B * (L * (H + L + C) + H * H + H * C)
    bytes_accessed = (image.size * 4 + wx.size * 2 + wh.size * 2
                      + bias.size * 4 + B * (L + 256) * 4)

    packed = pl.pallas_call(
        kernel,
        out_shape=jax.ShapeDtypeStruct((B, L + 256), jnp.float32),
        in_specs=[vmem, vmem, vmem, vmem],
        out_specs=vmem,
        cost_estimate=pl.CostEstimate(flops=flops, transcendentals=0,
                                      bytes_accessed=bytes_accessed),
    )(image, wx, wh, bias)

    proj = packed[:, :L]
    out1 = packed[:, L:L + C]
    out2 = packed[:, L + 128:L + 128 + C]
    return out1, out2, proj


def init_reference_params(key, latent_size, hidden_size, label_num):
    """f32 parameters matching the PyTorch module's init (weights stored (in, out))."""
    k = jax.random.split(key, 5)
    w1 = 0.02 * jax.random.normal(k[0], (latent_size, hidden_size), jnp.float32)
    w2 = 0.02 * jax.random.normal(k[1], (hidden_size, hidden_size), jnp.float32)
    wc1 = 0.02 * jax.random.normal(k[2], (hidden_size, label_num), jnp.float32)
    wc2 = 0.02 * jax.random.normal(k[3], (latent_size, label_num), jnp.float32)
    # projection_head: orthogonal parametrization (QR once at init in plain JAX).
    q, _ = jnp.linalg.qr(jax.random.normal(k[4], (latent_size, latent_size), jnp.float32))
    wp = q.T  # stored as (in, out); q orthogonal => q.T orthogonal
    return dict(
        w1=w1, b1=jnp.zeros((1, hidden_size), jnp.float32),
        w2=w2, b2=jnp.zeros((1, hidden_size), jnp.float32),
        wc1=wc1, bc1=jnp.zeros((1, label_num), jnp.float32),
        wp=wp, wc2=wc2, bc2=jnp.zeros((1, label_num), jnp.float32),
    )


def prepare_kernel_params(p):
    """One-time prep: fold wp@wc2, fuse/pack weights into 2 bf16 slabs + 1 f32 bias slab.

    Column-slice starts inside the kernel (0, H, H+L) are lane-aligned for
    H, L multiples of 128. Biases stay f32 (VPU path on every generation).
    """
    L, H = p["w1"].shape
    C = p["wc1"].shape[1]
    assert H % 128 == 0 and L % 128 == 0 and C <= 128, "layout assumptions"

    wpc2 = p["wp"] @ p["wc2"]                                       # folded head-2 weight (L, C)
    wx = jnp.concatenate([p["w1"], p["wp"], wpc2], axis=1).astype(jnp.bfloat16)   # (L, H+L+C)
    wh = jnp.concatenate([p["w2"], p["wc1"]], axis=1).astype(jnp.bfloat16)        # (H, H+C)

    width = H + L + C
    bias = jnp.zeros((2, width), jnp.float32)
    bias = bias.at[0, :H].set(p["b1"][0])
    bias = bias.at[0, H + L:H + L + C].set(p["bc2"][0])
    bias = bias.at[1, :H].set(p["b2"][0])
    bias = bias.at[1, H:H + C].set(p["bc1"][0])
    return dict(wx=wx, wh=wh, bias=bias)


def _reference(image, p):
    """Pure-JAX f32 reference matching the PyTorch forward (eval mode)."""
    x0 = image[:, 0, :]
    h = jnp.maximum(x0 @ p["w1"] + p["b1"], 0.0)
    h = jnp.maximum(h @ p["w2"] + p["b2"], 0.0)
    out1 = h @ p["wc1"] + p["bc1"]
    proj = x0 @ p["wp"]
    out2 = proj @ p["wc2"] + p["bc2"]
    return out1, out2, proj


if __name__ == "__main__":
    # Small shapes consistent with the module's forward:
    # image (B, S, latent); latent=256, d_model(hidden)=128, labels=8.
    B, S, LATENT, HIDDEN, LABELS = 8, 4, 256, 128, 8

    key = jax.random.PRNGKey(0)
    pkey, xkey = jax.random.split(key)
    ref_params = init_reference_params(pkey, LATENT, HIDDEN, LABELS)
    params = prepare_kernel_params(ref_params)
    image = jax.random.normal(xkey, (B, S, LATENT), jnp.float32)

    out1, out2, proj = teacher_image_model_forward(image, params, task_name="classification")
    jax.block_until_ready((out1, out2, proj))

    r1, r2, rp = _reference(image, ref_params)
    # bf16 weights + folded wpc2 => tolerance sized for bf16 rounding.
    assert jnp.allclose(out1, r1, rtol=3e-2, atol=3e-2), float(jnp.max(jnp.abs(out1 - r1)))
    assert jnp.allclose(out2, r2, rtol=3e-2, atol=3e-2), float(jnp.max(jnp.abs(out2 - r2)))
    assert jnp.allclose(proj, rp, rtol=3e-2, atol=3e-2), float(jnp.max(jnp.abs(proj - rp)))

    # 'sts-b' branch smoke test (static output ReLU on out1/out2 only).
    s1, s2, sp = teacher_image_model_forward(image, params, task_name="sts-b")
    jax.block_until_ready((s1, s2, sp))
    assert bool(jnp.all(s1 >= 0)) and bool(jnp.all(s2 >= 0))
    assert jnp.allclose(sp, rp, rtol=3e-2, atol=3e-2)

    print("KERNEL_OK")
</pallas_src>

<mosaic_0001>
module attributes {stable_mosaic.version = 11 : i64} {
  func.func @_teacher_kernel(%arg0: memref<8x4x256xf32, #tpu.memory_space<vmem>>, %arg1: memref<256x392xbf16, #tpu.memory_space<vmem>>, %arg2: memref<128x136xbf16, #tpu.memory_space<vmem>>, %arg3: memref<2x392xf32, #tpu.memory_space<vmem>>, %arg4: memref<8x512xf32, #tpu.memory_space<vmem>>) attributes {dimension_semantics = [], scalar_prefetch = 0 : i64, scratch_operands = 0 : i64, tpu.core_type = #tpu.core_type<tc>} {
    %c0 = arith.constant 0 : index
    %c0_0 = arith.constant 0 : index
    %c0_1 = arith.constant 0 : index
    %0 = vector.load %arg0[%c0, %c0_0, %c0_1] : memref<8x4x256xf32, #tpu.memory_space<vmem>>, vector<8x4x256xf32>
    %1 = vector.extract_strided_slice %0 {offsets = [0, 0, 0], sizes = [8, 1, 256], strides = [1, 1, 1]} : vector<8x4x256xf32> to vector<8x1x256xf32>
    %2 = vector.shape_cast %1 : vector<8x1x256xf32> to vector<8x256xf32>
    %3 = arith.truncf %2 : vector<8x256xf32> to vector<8x256xbf16>
    %c0_2 = arith.constant 0 : index
    %c0_3 = arith.constant 0 : index
    %4 = vector.load %arg3[%c0_2, %c0_3] : memref<2x392xf32, #tpu.memory_space<vmem>>, vector<1x392xf32>
    %c0_4 = arith.constant 0 : index
    %c0_5 = arith.constant 0 : index
    %5 = vector.load %arg1[%c0_4, %c0_5] : memref<256x392xbf16, #tpu.memory_space<vmem>>, vector<256x392xbf16>
    %cst = arith.constant dense<0.000000e+00> : vector<8x392xf32>
    %6 = tpu.matmul %3, %5, %cst {dimension_numbers = #tpu.dot_dimension_numbers<[1], [0], [0], [1], [0, 0, 1, 1], [], []>} : vector<8x256xbf16>, vector<256x392xbf16>, vector<8x392xf32> -> vector<8x392xf32>
    %7 = vector.broadcast %4 : vector<1x392xf32> to vector<8x392xf32>
    %8 = arith.addf %6, %7 : vector<8x392xf32>
    %9 = vector.extract_strided_slice %8 {offsets = [0, 0], sizes = [8, 128], strides = [1, 1]} : vector<8x392xf32> to vector<8x128xf32>
    %cst_6 = arith.constant 0.000000e+00 : f32
    %10 = vector.broadcast %cst_6 : f32 to vector<8x128xf32>
    %11 = arith.maximumf %9, %10 : vector<8x128xf32>
    %12 = arith.truncf %11 : vector<8x128xf32> to vector<8x128xbf16>
    %13 = vector.extract_strided_slice %8 {offsets = [0, 128], sizes = [8, 256], strides = [1, 1]} : vector<8x392xf32> to vector<8x256xf32>
    %14 = vector.extract_strided_slice %8 {offsets = [0, 384], sizes = [8, 8], strides = [1, 1]} : vector<8x392xf32> to vector<8x8xf32>
    %c1 = arith.constant 1 : index
    %c0_7 = arith.constant 0 : index
    %15 = vector.load %arg3[%c1, %c0_7] : memref<2x392xf32, #tpu.memory_space<vmem>>, vector<1x128xf32>
    %c1_8 = arith.constant 1 : index
    %c128 = arith.constant 128 : index
    %16 = vector.load %arg3[%c1_8, %c128] : memref<2x392xf32, #tpu.memory_space<vmem>>, vector<1x8xf32>
    %c0_9 = arith.constant 0 : index
    %c0_10 = arith.constant 0 : index
    %17 = vector.load %arg2[%c0_9, %c0_10] : memref<128x136xbf16, #tpu.memory_space<vmem>>, vector<128x128xbf16>
    %cst_11 = arith.constant dense<0.000000e+00> : vector<8x128xf32>
    %18 = tpu.matmul %12, %17, %cst_11 {dimension_numbers = #tpu.dot_dimension_numbers<[1], [0], [0], [1], [0, 0, 1, 1], [], []>} : vector<8x128xbf16>, vector<128x128xbf16>, vector<8x128xf32> -> vector<8x128xf32>
    %19 = vector.broadcast %15 : vector<1x128xf32> to vector<8x128xf32>
    %20 = arith.addf %18, %19 : vector<8x128xf32>
    %cst_12 = arith.constant 0.000000e+00 : f32
    %21 = vector.broadcast %cst_12 : f32 to vector<8x128xf32>
    %22 = arith.maximumf %20, %21 : vector<8x128xf32>
    %23 = arith.truncf %22 : vector<8x128xf32> to vector<8x128xbf16>
    %c0_13 = arith.constant 0 : index
    %c128_14 = arith.constant 128 : index
    %24 = vector.load %arg2[%c0_13, %c128_14] : memref<128x136xbf16, #tpu.memory_space<vmem>>, vector<128x8xbf16>
    %cst_15 = arith.constant dense<0.000000e+00> : vector<8x8xf32>
    %25 = tpu.matmul %23, %24, %cst_15 {dimension_numbers = #tpu.dot_dimension_numbers<[1], [0], [0], [1], [0, 0, 1, 1], [], []>} : vector<8x128xbf16>, vector<128x8xbf16>, vector<8x8xf32> -> vector<8x8xf32>
    %26 = vector.broadcast %16 : vector<1x8xf32> to vector<8x8xf32>
    %27 = arith.addf %25, %26 : vector<8x8xf32>
    %cst_16 = arith.constant 0.000000e+00 : f32
    %28 = vector.broadcast %cst_16 : f32 to vector<8x120xf32>
    %29 = tpu.concatenate %13, %27, %28, %14, %28 in 1 : vector<8x256xf32>, vector<8x8xf32>, vector<8x120xf32>, vector<8x8xf32>, vector<8x120xf32> -> vector<8x512xf32>
    %c0_17 = arith.constant 0 : index
    %c0_18 = arith.constant 0 : index
    %30 = vector.load %arg4[%c0_17, %c0_18] : memref<8x512xf32, #tpu.memory_space<vmem>>, vector<8x512xf32>
    tpu.vector_store %arg4[%c0_17, %c0_18], %29 {strides = array<i32>} : memref<8x512xf32, #tpu.memory_space<vmem>>, vector<8x512xf32>,
    return
  }
}

</mosaic_0001>

<llo_original>
// kernel: teacher_image_model_forward.1
$region0: #{teacher_image_model_forward.1}
  #allocation0 [shape = 'u32[]', space=smem, size = 0x4, offset = 0x4, fixed_abs, tag = 'smem constant byte address 0x4 - core index']
  #allocation1 [shape = 'u32[144,128]{1,0:T(1,128)}', space=vmem, size = 0x12000, scoped, tag = 'internal scratch']
  %s0 = inlined_call_operand.vmem [shape: f32[8,4,256], index: 0, kind: input, shape index: {}]
  %s1 = inlined_call_operand.vmem [shape: bf16[256,392], index: 1, kind: input, shape index: {}]
  %s2 = inlined_call_operand.vmem [shape: bf16[128,136], index: 2, kind: input, shape index: {}]
  %s3 = inlined_call_operand.vmem [shape: f32[2,392], index: 3, kind: input, shape index: {}]
  %s4 = inlined_call_operand.vmem [shape: f32[8,512], index: 4, kind: output, shape index: {}]
  %s5 = sld [smem:[#allocation0]]
  $region26: #{teacher_image_model_forward.1} parent=0
    _
  %s7 = ssub.s32 1, %s5
  %s8 = scalar_select 0, %s7, %s5
  // Predicated region
  $region2: #{teacher_image_model_forward.1} parent=0 // pred_check
    _
  $region3: #{teacher_image_model_forward.1} parent=0 // pred_check_branch
    %10 = sbr.rel (0) target = $region5
  $region4: #{teacher_image_model_forward.1} parent=0 // pred_region
    _
  $region5: #{teacher_image_model_forward.1} parent=0 // pred_fallthru
    _
  // Predicated region
  $region6: #{teacher_image_model_forward.1} parent=0 // pred_check
    _
  $region7: #{teacher_image_model_forward.1} parent=0 // pred_check_branch
    %12 = sbr.rel (0) target = $region9
  $region8: #{teacher_image_model_forward.1} parent=0 // pred_region
    _
  $region9: #{teacher_image_model_forward.1} parent=0 // pred_fallthru
    _
  // Predicated region
  $region10: #{teacher_image_model_forward.1} parent=0 // pred_check
    _
  $region11: #{teacher_image_model_forward.1} parent=0 // pred_check_branch
    %14 = sbr.rel (0) target = $region13
  $region12: #{teacher_image_model_forward.1} parent=0 // pred_region
    _
  $region13: #{teacher_image_model_forward.1} parent=0 // pred_fallthru
    _
  // Predicated region
  $region14: #{teacher_image_model_forward.1} parent=0 // pred_check
    _
  $region15: #{teacher_image_model_forward.1} parent=0 // pred_check_branch
    %16 = sbr.rel (0) target = $region17
  $region16: #{teacher_image_model_forward.1} parent=0 // pred_region
    _
  $region17: #{teacher_image_model_forward.1} parent=0 // pred_fallthru
    _
  %v18 = vld [vmem:[%s0] sm:$0xff]
  %v19 = vld [vmem:[%s0 + $0x8] sm:$0xff]
  %v20 = vld [vmem:[%s0 + $0x10] sm:$0xff]
  %v21 = vld [vmem:[%s0 + $0x18] sm:$0xff]
  %v22 = vld [vmem:[%s0 + $0x20] sm:$0xff]
  %v23 = vld [vmem:[%s0 + $0x28] sm:$0xff]
  %v24 = vld [vmem:[%s0 + $0x30] sm:$0xff]
  %v25 = vld [vmem:[%s0 + $0x38] sm:$0xff]
  %v34 = vlaneseq
  %v35 = vshrl.u32 %v34, 7
  %v36 = vsub.s32 0, %v35
  %v37 = vrot.slane %v18, %v36
  %v38 = vlaneseq
  %v39 = vshrl.u32 %v38, 7
  %v40 = vsub.s32 4, %v39
  %v41 = vrot.slane %v18, %v40
  %v42 = vlaneseq
  %v43 = vshrl.u32 %v42, 7
  %v44 = vsub.s32 0, %v43
  %v45 = vrot.slane %v19, %v44
  %v46 = vlaneseq
  %v47 = vshrl.u32 %v46, 7
  %v48 = vsub.s32 4, %v47
  %v49 = vrot.slane %v19, %v48
  %v50 = vlaneseq
  %v51 = vshrl.u32 %v50, 7
  %v52 = vsub.s32 0, %v51
  %v53 = vrot.slane %v20, %v52
  %v54 = vlaneseq
  %v55 = vshrl.u32 %v54, 7
  %v56 = vsub.s32 4, %v55
  %v57 = vrot.slane %v20, %v56
  %v58 = vlaneseq
  %v59 = vshrl.u32 %v58, 7
  %v60 = vsub.s32 0, %v59
  %v61 = vrot.slane %v21, %v60
  %v62 = vlaneseq
  %v63 = vshrl.u32 %v62, 7
  %v64 = vsub.s32 4, %v63
  %v65 = vrot.slane %v21, %v64
  %v66 = vlaneseq
  %v67 = vshrl.u32 %v66, 7
  %v68 = vsub.s32 0, %v67
  %v69 = vrot.slane %v22, %v68
  %v70 = vlaneseq
  %v71 = vshrl.u32 %v70, 7
  %v72 = vsub.s32 4, %v71
  %v73 = vrot.slane %v22, %v72
  %v74 = vlaneseq
  %v75 = vshrl.u32 %v74, 7
  %v76 = vsub.s32 0, %v75
  %v77 = vrot.slane %v23, %v76
  %v78 = vlaneseq
  %v79 = vshrl.u32 %v78, 7
  %v80 = vsub.s32 4, %v79
  %v81 = vrot.slane %v23, %v80
  %v82 = vlaneseq
  %v83 = vshrl.u32 %v82, 7
  %v84 = vsub.s32 0, %v83
  %v85 = vrot.slane %v24, %v84
  %v86 = vlaneseq
  %v87 = vshrl.u32 %v86, 7
  %v88 = vsub.s32 4, %v87
  %v89 = vrot.slane %v24, %v88
  %v90 = vlaneseq
  %v91 = vshrl.u32 %v90, 7
  %v92 = vsub.s32 0, %v91
  %v93 = vrot.slane %v25, %v92
  %v94 = vlaneseq
  %v95 = vshrl.u32 %v94, 7
  %v96 = vsub.s32 4, %v95
  %v97 = vrot.slane %v25, %v96
  %v114 = vpack.c.bf16 %v37, %v37
  %v115 = vpack.c.bf16 %v41, %v41
  %v116 = vpack.c.bf16 %v45, %v45
  %v117 = vpack.c.bf16 %v49, %v49
  %v118 = vpack.c.bf16 %v53, %v53
  %v119 = vpack.c.bf16 %v57, %v57
  %v120 = vpack.c.bf16 %v61, %v61
  %v121 = vpack.c.bf16 %v65, %v65
  %v122 = vpack.c.bf16 %v69, %v69
  %v123 = vpack.c.bf16 %v73, %v73
  %v124 = vpack.c.bf16 %v77, %v77
  %v125 = vpack.c.bf16 %v81, %v81
  %v126 = vpack.c.bf16 %v85, %v85
  %v127 = vpack.c.bf16 %v89, %v89
  %v128 = vpack.c.bf16 %v93, %v93
  %v129 = vpack.c.bf16 %v97, %v97
  %v130 = vld [vmem:[%s3] ss:$2 sm:$0xf]
  %v131 = vld [vmem:[%s1] sm:$0xff]
  %v132 = vld [vmem:[%s1 + $0x8] sm:$0xff]
  %v133 = vld [vmem:[%s1 + $0x10] sm:$0xff]
  %v134 = vld [vmem:[%s1 + $0x18] sm:$0xff]
  %v135 = vld [vmem:[%s1 + $0x20] sm:$0xff]
  %v136 = vld [vmem:[%s1 + $0x28] sm:$0xff]
  %v137 = vld [vmem:[%s1 + $0x30] sm:$0xff]
  %v138 = vld [vmem:[%s1 + $0x38] sm:$0xff]
  %v139 = vld [vmem:[%s1 + $0x40] sm:$0xff]
  %v140 = vld [vmem:[%s1 + $0x48] sm:$0xff]
  %v141 = vld [vmem:[%s1 + $0x50] sm:$0xff]
  %v142 = vld [vmem:[%s1 + $0x58] sm:$0xff]
  %v143 = vld [vmem:[%s1 + $0x60] sm:$0xff]
  %v144 = vld [vmem:[%s1 + $0x68] sm:$0xff]
  %v145 = vld [vmem:[%s1 + $0x70] sm:$0xff]
  %v146 = vld [vmem:[%s1 + $0x78] sm:$0xff]
  %v147 = vld [vmem:[%s1 + $0x80] sm:$0xff]
  %v148 = vld [vmem:[%s1 + $0x88] sm:$0xff]
  %v149 = vld [vmem:[%s1 + $0x90] sm:$0xff]
  %v150 = vld [vmem:[%s1 + $0x98] sm:$0xff]
  %v151 = vld [vmem:[%s1 + $0xa0] sm:$0xff]
  %v152 = vld [vmem:[%s1 + $0xa8] sm:$0xff]
  %v153 = vld [vmem:[%s1 + $0xb0] sm:$0xff]
  %v154 = vld [vmem:[%s1 + $0xb8] sm:$0xff]
  %v155 = vld [vmem:[%s1 + $0xc0] sm:$0xff]
  %v156 = vld [vmem:[%s1 + $0xc8] sm:$0xff]
  %v157 = vld [vmem:[%s1 + $0xd0] sm:$0xff]
  %v158 = vld [vmem:[%s1 + $0xd8] sm:$0xff]
  %v159 = vld [vmem:[%s1 + $0xe0] sm:$0xff]
  %v160 = vld [vmem:[%s1 + $0xe8] sm:$0xff]
  %v161 = vld [vmem:[%s1 + $0xf0] sm:$0xff]
  %v162 = vld [vmem:[%s1 + $0xf8] sm:$0xff]
  %v163 = vld [vmem:[%s1 + $0x100] sm:$0xff]
  %v164 = vld [vmem:[%s1 + $0x108] sm:$0xff]
  %v165 = vld [vmem:[%s1 + $0x110] sm:$0xff]
  %v166 = vld [vmem:[%s1 + $0x118] sm:$0xff]
  %v167 = vld [vmem:[%s1 + $0x120] sm:$0xff]
  %v168 = vld [vmem:[%s1 + $0x128] sm:$0xff]
  %v169 = vld [vmem:[%s1 + $0x130] sm:$0xff]
  %v170 = vld [vmem:[%s1 + $0x138] sm:$0xff]
  %v171 = vld [vmem:[%s1 + $0x140] sm:$0xff]
  %v172 = vld [vmem:[%s1 + $0x148] sm:$0xff]
  %v173 = vld [vmem:[%s1 + $0x150] sm:$0xff]
  %v174 = vld [vmem:[%s1 + $0x158] sm:$0xff]
  %v175 = vld [vmem:[%s1 + $0x160] sm:$0xff]
  %v176 = vld [vmem:[%s1 + $0x168] sm:$0xff]
  %v177 = vld [vmem:[%s1 + $0x170] sm:$0xff]
  %v178 = vld [vmem:[%s1 + $0x178] sm:$0xff]
  %v179 = vld [vmem:[%s1 + $0x180] sm:$0xff]
  %v180 = vld [vmem:[%s1 + $0x188] sm:$0xff]
  %v181 = vld [vmem:[%s1 + $0x190] sm:$0xff]
  %v182 = vld [vmem:[%s1 + $0x198] sm:$0xff]
  %v183 = vld [vmem:[%s1 + $0x1a0] sm:$0xff]
  %v184 = vld [vmem:[%s1 + $0x1a8] sm:$0xff]
  %v185 = vld [vmem:[%s1 + $0x1b0] sm:$0xff]
  %v186 = vld [vmem:[%s1 + $0x1b8] sm:$0xff]
  %v187 = vld [vmem:[%s1 + $0x1c0] sm:$0xff]
  %v188 = vld [vmem:[%s1 + $0x1c8] sm:$0xff]
  %v189 = vld [vmem:[%s1 + $0x1d0] sm:$0xff]
  %v190 = vld [vmem:[%s1 + $0x1d8] sm:$0xff]
  %v191 = vld [vmem:[%s1 + $0x1e0] sm:$0xff]
  %v192 = vld [vmem:[%s1 + $0x1e8] sm:$0xff]
  %v193 = vld [vmem:[%s1 + $0x1f0] sm:$0xff]
  %v194 = vld [vmem:[%s1 + $0x1f8] sm:$0xff]
  %v196 = vlaneseq
  %v197 = vshrl.u32 %v196, 7
  %v198 = vsub.s32 0, %v197
  %v199 = vrot.slane %v130, %v198
  %v200 = vlaneseq
  %v201 = vshrl.u32 %v200, 7
  %v202 = vsub.s32 1, %v201
  %v203 = vrot.slane %v130, %v202
  %v204 = vlaneseq
  %v205 = vshrl.u32 %v204, 7
  %v206 = vsub.s32 2, %v205
  %v207 = vrot.slane %v130, %v206
  %v208 = vlaneseq
  %v209 = vshrl.u32 %v208, 7
  %v210 = vsub.s32 3, %v209
  %v211 = vrot.slane %v130, %v210
  %v232 = vunpack.c.l.b16 %v114
  %v233 = vunpack.c.l.b16 %v115
  %v234 = vunpack.c.l.b16 %v116
  %v235 = vunpack.c.l.b16 %v117
  %v236 = vunpack.c.l.b16 %v118
  %v237 = vunpack.c.l.b16 %v119
  %v238 = vunpack.c.l.b16 %v120
  %v239 = vunpack.c.l.b16 %v121
  %v240 = vunpack.c.l.b16 %v122
  %v241 = vunpack.c.l.b16 %v123
  %v242 = vunpack.c.l.b16 %v124
  %v243 = vunpack.c.l.b16 %v125
  %v244 = vunpack.c.l.b16 %v126
  %v245 = vunpack.c.l.b16 %v127
  %v246 = vunpack.c.l.b16 %v128
  %v247 = vunpack.c.l.b16 %v129
  %v248 = vrot.slane %v234, 7
  %vm249 = vcmask 1041409
  %v250 = vsel %vm249, %v248, %v232
  %v251 = vrot.slane %v236, 6
  %vm252 = vcmask 1042434
  %v253 = vsel %vm252, %v251, %v250
  %v254 = vrot.slane %v238, 5
  %vm255 = vcmask 1043459
  %v256 = vsel %vm255, %v254, %v253
  %v257 = vrot.slane %v240, 4
  %vm258 = vcmask 1044484
  %v259 = vsel %vm258, %v257, %v256
  %v260 = vrot.slane %v242, 3
  %vm261 = vcmask 1045509
  %v262 = vsel %vm261, %v260, %v259
  %v263 = vrot.slane %v244, 2
  %vm264 = vcmask 1046534
  %v265 = vsel %vm264, %v263, %v262
  %v266 = vrot.slane %v246, 1
  %vm267 = vcmask 1047559
  %v268 = vsel %vm267, %v266, %v265
  %v269 = vrot.slane %v235, 7
  %v270 = vsel %vm249, %v269, %v233
  %v271 = vrot.slane %v237, 6
  %v272 = vsel %vm252, %v271, %v270
  %v273 = vrot.slane %v239, 5
  %v274 = vsel %vm255, %v273, %v272
  %v275 = vrot.slane %v241, 4
  %v276 = vsel %vm258, %v275, %v274
  %v277 = vrot.slane %v243, 3
  %v278 = vsel %vm261, %v277, %v276
  %v279 = vrot.slane %v245, 2
  %v280 = vsel %vm264, %v279, %v278
  %v281 = vrot.slane %v247, 1
  %v282 = vsel %vm267, %v281, %v280
  %v283 = vpack.c.b16 %v268, %v268
  %v284 = vpack.c.b16 %v282, %v282
  %v351 = vunpack.c.l.b16 %v131
  %v352 = vunpack.c.h.b16 %v131
  %v353 = vunpack.c.l.b16 %v132
  %v354 = vunpack.c.h.b16 %v132
  %v355 = vunpack.c.l.b16 %v133
  %v356 = vunpack.c.h.b16 %v133
  %v357 = vunpack.c.l.b16 %v134
  %v358 = vunpack.c.h.b16 %v134
  %v359 = vunpack.c.l.b16 %v135
  %v360 = vunpack.c.h.b16 %v135
  %v361 = vunpack.c.l.b16 %v136
  %v362 = vunpack.c.h.b16 %v136
  %v363 = vunpack.c.l.b16 %v137
  %v364 = vunpack.c.h.b16 %v137
  %v365 = vunpack.c.l.b16 %v138
  %v366 = vunpack.c.h.b16 %v138
  %v367 = vunpack.c.l.b16 %v139
  %v368 = vunpack.c.h.b16 %v139
  %v369 = vunpack.c.l.b16 %v140
  %v370 = vunpack.c.h.b16 %v140
  %v371 = vunpack.c.l.b16 %v141
  %v372 = vunpack.c.h.b16 %v141
  %v373 = vunpack.c.l.b16 %v142
  %v374 = vunpack.c.h.b16 %v142
  %v375 = vunpack.c.l.b16 %v143
  %v376 = vunpack.c.h.b16 %v143
  %v377 = vunpack.c.l.b16 %v144
  %v378 = vunpack.c.h.b16 %v144
  %v379 = vunpack.c.l.b16 %v145
  %v380 = vunpack.c.h.b16 %v145
  %v381 = vunpack.c.l.b16 %v146
  %v382 = vunpack.c.h.b16 %v146
  %v383 = vunpack.c.l.b16 %v147
  %v384 = vunpack.c.h.b16 %v147
  %v385 = vunpack.c.l.b16 %v148
  %v386 = vunpack.c.h.b16 %v148
  %v387 = vunpack.c.l.b16 %v149
  %v388 = vunpack.c.h.b16 %v149
  %v389 = vunpack.c.l.b16 %v150
  %v390 = vunpack.c.h.b16 %v150
  %v391 = vunpack.c.l.b16 %v151
  %v392 = vunpack.c.h.b16 %v151
  %v393 = vunpack.c.l.b16 %v152
  %v394 = vunpack.c.h.b16 %v152
  %v395 = vunpack.c.l.b16 %v153
  %v396 = vunpack.c.h.b16 %v153
  %v397 = vunpack.c.l.b16 %v154
  %v398 = vunpack.c.h.b16 %v154
  %v399 = vunpack.c.l.b16 %v155
  %v400 = vunpack.c.h.b16 %v155
  %v401 = vunpack.c.l.b16 %v156
  %v402 = vunpack.c.h.b16 %v156
  %v403 = vunpack.c.l.b16 %v157
  %v404 = vunpack.c.h.b16 %v157
  %v405 = vunpack.c.l.b16 %v158
  %v406 = vunpack.c.h.b16 %v158
  %v407 = vunpack.c.l.b16 %v159
  %v408 = vunpack.c.h.b16 %v159
  %v409 = vunpack.c.l.b16 %v160
  %v410 = vunpack.c.h.b16 %v160
  %v411 = vunpack.c.l.b16 %v161
  %v412 = vunpack.c.h.b16 %v161
  %v413 = vunpack.c.l.b16 %v162
  %v414 = vunpack.c.h.b16 %v162
  %v415 = vunpack.c.l.b16 %v163
  %v416 = vunpack.c.h.b16 %v163
  %v417 = vunpack.c.l.b16 %v164
  %v418 = vunpack.c.h.b16 %v164
  %v419 = vunpack.c.l.b16 %v165
  %v420 = vunpack.c.h.b16 %v165
  %v421 = vunpack.c.l.b16 %v166
  %v422 = vunpack.c.h.b16 %v166
  %v423 = vunpack.c.l.b16 %v167
  %v424 = vunpack.c.h.b16 %v167
  %v425 = vunpack.c.l.b16 %v168
  %v426 = vunpack.c.h.b16 %v168
  %v427 = vunpack.c.l.b16 %v169
  %v428 = vunpack.c.h.b16 %v169
  %v429 = vunpack.c.l.b16 %v170
  %v430 = vunpack.c.h.b16 %v170
  %v431 = vunpack.c.l.b16 %v171
  %v432 = vunpack.c.h.b16 %v171
  %v433 = vunpack.c.l.b16 %v172
  %v434 = vunpack.c.h.b16 %v172
  %v435 = vunpack.c.l.b16 %v173
  %v436 = vunpack.c.h.b16 %v173
  %v437 = vunpack.c.l.b16 %v174
  %v438 = vunpack.c.h.b16 %v174
  %v439 = vunpack.c.l.b16 %v175
  %v440 = vunpack.c.h.b16 %v175
  %v441 = vunpack.c.l.b16 %v176
  %v442 = vunpack.c.h.b16 %v176
  %v443 = vunpack.c.l.b16 %v177
  %v444 = vunpack.c.h.b16 %v177
  %v445 = vunpack.c.l.b16 %v178
  %v446 = vunpack.c.h.b16 %v178
  %v447 = vunpack.c.l.b16 %v179
  %v448 = vunpack.c.h.b16 %v179
  %v449 = vunpack.c.l.b16 %v180
  %v450 = vunpack.c.h.b16 %v180
  %v451 = vunpack.c.l.b16 %v181
  %v452 = vunpack.c.h.b16 %v181
  %v453 = vunpack.c.l.b16 %v182
  %v454 = vunpack.c.h.b16 %v182
  %v455 = vunpack.c.l.b16 %v183
  %v456 = vunpack.c.h.b16 %v183
  %v457 = vunpack.c.l.b16 %v184
  %v458 = vunpack.c.h.b16 %v184
  %v459 = vunpack.c.l.b16 %v185
  %v460 = vunpack.c.h.b16 %v185
  %v461 = vunpack.c.l.b16 %v186
  %v462 = vunpack.c.h.b16 %v186
  %v463 = vunpack.c.l.b16 %v187
  %v464 = vunpack.c.h.b16 %v187
  %v465 = vunpack.c.l.b16 %v188
  %v466 = vunpack.c.h.b16 %v188
  %v467 = vunpack.c.l.b16 %v189
  %v468 = vunpack.c.h.b16 %v189
  %v469 = vunpack.c.l.b16 %v190
  %v470 = vunpack.c.h.b16 %v190
  %v471 = vunpack.c.l.b16 %v191
  %v472 = vunpack.c.h.b16 %v191
  %v473 = vunpack.c.l.b16 %v192
  %v474 = vunpack.c.h.b16 %v192
  %v475 = vunpack.c.l.b16 %v193
  %v476 = vunpack.c.h.b16 %v193
  %v477 = vunpack.c.l.b16 %v194
  %v478 = vunpack.c.h.b16 %v194
  %v479 = vpack.c.b16 %v355, %v351
  %v480 = vpack.c.b16 %v356, %v352
  %v481 = vpack.c.b16 %v357, %v353
  %v482 = vpack.c.b16 %v358, %v354
  %v483 = vpack.c.b16 %v363, %v359
  %v484 = vpack.c.b16 %v364, %v360
  %v485 = vpack.c.b16 %v365, %v361
  %v486 = vpack.c.b16 %v366, %v362
  %v487 = vpack.c.b16 %v371, %v367
  %v488 = vpack.c.b16 %v372, %v368
  %v489 = vpack.c.b16 %v373, %v369
  %v490 = vpack.c.b16 %v374, %v370
  %v491 = vpack.c.b16 %v379, %v375
  %v492 = vpack.c.b16 %v380, %v376
  %v493 = vpack.c.b16 %v381, %v377
  %v494 = vpack.c.b16 %v382, %v378
  %v495 = vpack.c.b16 %v387, %v383
  %v496 = vpack.c.b16 %v388, %v384
  %v497 = vpack.c.b16 %v389, %v385
  %v498 = vpack.c.b16 %v390, %v386
  %v499 = vpack.c.b16 %v395, %v391
  %v500 = vpack.c.b16 %v396, %v392
  %v501 = vpack.c.b16 %v397, %v393
  %v502 = vpack.c.b16 %v398, %v394
  %v503 = vpack.c.b16 %v403, %v399
  %v504 = vpack.c.b16 %v404, %v400
  %v505 = vpack.c.b16 %v405, %v401
  %v506 = vpack.c.b16 %v406, %v402
  %v507 = vpack.c.b16 %v411, %v407
  %v508 = vpack.c.b16 %v412, %v408
  %v509 = vpack.c.b16 %v413, %v409
  %v510 = vpack.c.b16 %v414, %v410
  %v511 = vpack.c.b16 %v419, %v415
  %v512 = vpack.c.b16 %v420, %v416
  %v513 = vpack.c.b16 %v421, %v417
  %v514 = vpack.c.b16 %v422, %v418
  %v515 = vpack.c.b16 %v427, %v423
  %v516 = vpack.c.b16 %v428, %v424
  %v517 = vpack.c.b16 %v429, %v425
  %v518 = vpack.c.b16 %v430, %v426
  %v519 = vpack.c.b16 %v435, %v431
  %v520 = vpack.c.b16 %v436, %v432
  %v521 = vpack.c.b16 %v437, %v433
  %v522 = vpack.c.b16 %v438, %v434
  %v523 = vpack.c.b16 %v443, %v439
  %v524 = vpack.c.b16 %v444, %v440
  %v525 = vpack.c.b16 %v445, %v441
  %v526 = vpack.c.b16 %v446, %v442
  %v527 = vpack.c.b16 %v451, %v447
  %v528 = vpack.c.b16 %v452, %v448
  %v529 = vpack.c.b16 %v453, %v449
  %v530 = vpack.c.b16 %v454, %v450
  %v531 = vpack.c.b16 %v459, %v455
  %v532 = vpack.c.b16 %v460, %v456
  %v533 = vpack.c.b16 %v461, %v457
  %v534 = vpack.c.b16 %v462, %v458
  %v535 = vpack.c.b16 %v467, %v463
  %v536 = vpack.c.b16 %v468, %v464
  %v537 = vpack.c.b16 %v469, %v465
  %v538 = vpack.c.b16 %v470, %v466
  %v539 = vpack.c.b16 %v475, %v471
  %v540 = vpack.c.b16 %v476, %v472
  %v541 = vpack.c.b16 %v477, %v473
  %v542 = vpack.c.b16 %v478, %v474
  %607 = vmatprep.subr.bf16.mxu0 %v480
  %608 = vmatpush1.bf16.msra.mxu0 %v479
  %609 = vmatprep.subr.bf16.mxu0 %v484
  %610 = vmatpush1.bf16.msra.mxu0 %v483
  %611 = vmatprep.subr.bf16.mxu0 %v488
  %612 = vmatpush1.bf16.msra.mxu0 %v487
  %613 = vmatprep.subr.bf16.mxu0 %v492
  %614 = vmatpush1.bf16.msra.mxu0 %v491
  %615 = vmatprep.subr.bf16.mxu0 %v496
  %616 = vmatpush1.bf16.msra.mxu0 %v495
  %617 = vmatprep.subr.bf16.mxu0 %v500
  %618 = vmatpush1.bf16.msra.mxu0 %v499
  %619 = vmatprep.subr.bf16.mxu0 %v504
  %620 = vmatpush1.bf16.msra.mxu0 %v503
  %621 = vmatprep.subr.bf16.mxu0 %v508
  %622 = vmatpush1.bf16.msra.mxu0 %v507
  %623 = vmatprep.subr.bf16.mxu0 %v512
  %624 = vmatpush1.bf16.msra.mxu0 %v511
  %625 = vmatprep.subr.bf16.mxu0 %v516
  %626 = vmatpush1.bf16.msra.mxu0 %v515
  %627 = vmatprep.subr.bf16.mxu0 %v520
  %628 = vmatpush1.bf16.msra.mxu0 %v519
  %629 = vmatprep.subr.bf16.mxu0 %v524
  %630 = vmatpush1.bf16.msra.mxu0 %v523
  %631 = vmatprep.subr.bf16.mxu0 %v528
  %632 = vmatpush1.bf16.msra.mxu0 %v527
  %633 = vmatprep.subr.bf16.mxu0 %v532
  %634 = vmatpush1.bf16.msra.mxu0 %v531
  %635 = vmatprep.subr.bf16.mxu0 %v536
  %636 = vmatpush1.bf16.msra.mxu0 %v535
  %637 = vmatprep.subr.bf16.mxu0 %v540
  %638 = vmatpush1.bf16.msra.mxu0 %v539
  %639 = vmatprep.mubr.bf16.mxu0 %v284
  %640 = vmatmul.mubr.bf16.gmra.mrb[0].mxu0 %v283
  %v641 = vpop.f32.mrb[0].mxu0
  %v642 = vadd.f32 %v199, %v641
  %v643 = vpop.f32.mrb[0].mxu0
  %v644 = vadd.f32 %v203, %v643
  %v645 = vpop.f32.mrb[0].mxu0
  %v646 = vpop.f32.mrb[0].mxu0
  %647 = vdwg.mxu0
  %648 = vmatprep.subr.bf16.mxu0 %v482
  %649 = vmatpush1.bf16.msra.mxu0 %v481
  %650 = vmatprep.subr.bf16.mxu0 %v486
  %651 = vmatpush1.bf16.msra.mxu0 %v485
  %652 = vmatprep.subr.bf16.mxu0 %v490
  %653 = vmatpush1.bf16.msra.mxu0 %v489
  %654 = vmatprep.subr.bf16.mxu0 %v494
  %655 = vmatpush1.bf16.msra.mxu0 %v493
  %656 = vmatprep.subr.bf16.mxu0 %v498
  %657 = vmatpush1.bf16.msra.mxu0 %v497
  %658 = vmatprep.subr.bf16.mxu0 %v502
  %659 = vmatpush1.bf16.msra.mxu0 %v501
  %660 = vmatprep.subr.bf16.mxu0 %v506
  %661 = vmatpush1.bf16.msra.mxu0 %v505
  %662 = vmatprep.subr.bf16.mxu0 %v510
  %663 = vmatpush1.bf16.msra.mxu0 %v509
  %664 = vmatprep.subr.bf16.mxu0 %v514
  %665 = vmatpush1.bf16.msra.mxu0 %v513
  %666 = vmatprep.subr.bf16.mxu0 %v518
  %667 = vmatpush1.bf16.msra.mxu0 %v517
  %668 = vmatprep.subr.bf16.mxu0 %v522
  %669 = vmatpush1.bf16.msra.mxu0 %v521
  %670 = vmatprep.subr.bf16.mxu0 %v526
  %671 = vmatpush1.bf16.msra.mxu0 %v525
  %672 = vmatprep.subr.bf16.mxu0 %v530
  %673 = vmatpush1.bf16.msra.mxu0 %v529
  %674 = vmatprep.subr.bf16.mxu0 %v534
  %675 = vmatpush1.bf16.msra.mxu0 %v533
  %676 = vmatprep.subr.bf16.mxu0 %v538
  %677 = vmatpush1.bf16.msra.mxu0 %v537
  %678 = vmatprep.subr.bf16.mxu0 %v542
  %679 = vmatpush1.bf16.msra.mxu0 %v541
  %680 = vmatprep.mubr.bf16.mxu0 %v284
  %681 = vmatmul.mubr.bf16.gmra.mrb[0].mxu0 %v283
  %v682 = vpop.f32.mrb[0].mxu0
  %v683 = vadd.f32 %v207, %v682
  %v684 = vpop.f32.mrb[0].mxu0
  %v685 = vadd.f32 %v211, %v684
  %v686 = vpop.f32.mrb[0].mxu0
  %v687 = vpop.f32.mrb[0].mxu0
  %688 = vdwg.mxu0
  %v689 = vmax.f32 %v642, 0.0
  %v690 = vpack.c.bf16 %v689, %v689
  %v691 = vld [vmem:[%s3 + $0x1] sm:$0x1]
  %v692 = vld [vmem:[%s3 + $0x3] sm:$0x1]
  %v693 = vld [vmem:[%s2] sm:$0xf]
  %v694 = vld [vmem:[%s2 + $0x8] sm:$0xf]
  %v695 = vld [vmem:[%s2 + $0x10] sm:$0xf]
  %v696 = vld [vmem:[%s2 + $0x18] sm:$0xf]
  %v697 = vld [vmem:[%s2 + $0x20] sm:$0xf]
  %v698 = vld [vmem:[%s2 + $0x28] sm:$0xf]
  %v699 = vld [vmem:[%s2 + $0x30] sm:$0xf]
  %v700 = vld [vmem:[%s2 + $0x38] sm:$0xf]
  %v701 = vld [vmem:[%s2 + $0x40] sm:$0xf]
  %v702 = vld [vmem:[%s2 + $0x48] sm:$0xf]
  %v703 = vld [vmem:[%s2 + $0x50] sm:$0xf]
  %v704 = vld [vmem:[%s2 + $0x58] sm:$0xf]
  %v705 = vld [vmem:[%s2 + $0x60] sm:$0xf]
  %v706 = vld [vmem:[%s2 + $0x68] sm:$0xf]
  %v707 = vld [vmem:[%s2 + $0x70] sm:$0xf]
  %v708 = vld [vmem:[%s2 + $0x78] sm:$0xf]
  %v709 = vlaneseq
  %v710 = vshrl.u32 %v709, 7
  %v711 = vsub.s32 0, %v710
  %v712 = vrot.slane %v691, %v711
  %v729 = vunpack.c.l.b16 %v693
  %v730 = vunpack.c.l.b16 %v694
  %v731 = vunpack.c.l.b16 %v695
  %v732 = vunpack.c.l.b16 %v696
  %v733 = vunpack.c.l.b16 %v697
  %v734 = vunpack.c.l.b16 %v698
  %v735 = vunpack.c.l.b16 %v699
  %v736 = vunpack.c.l.b16 %v700
  %v737 = vunpack.c.l.b16 %v701
  %v738 = vunpack.c.l.b16 %v702
  %v739 = vunpack.c.l.b16 %v703
  %v740 = vunpack.c.l.b16 %v704
  %v741 = vunpack.c.l.b16 %v705
  %v742 = vunpack.c.l.b16 %v706
  %v743 = vunpack.c.l.b16 %v707
  %v744 = vunpack.c.l.b16 %v708
  %v745 = vpack.c.b16 %v730, %v729
  %v746 = vpack.c.b16 %v732, %v731
  %v747 = vpack.c.b16 %v734, %v733
  %v748 = vpack.c.b16 %v736, %v735
  %v749 = vpack.c.b16 %v738, %v737
  %v750 = vpack.c.b16 %v740, %v739
  %v751 = vpack.c.b16 %v742, %v741
  %v752 = vpack.c.b16 %v744, %v743
  %761 = vmatprep.subr.bf16.mxu0 0
  %762 = vmatpush1.bf16.msra.mxu0 %v745
  %763 = vmatprep.subr.bf16.mxu0 0
  %764 = vmatpush1.bf16.msra.mxu0 %v746
  %765 = vmatprep.subr.bf16.mxu0 0
  %766 = vmatpush1.bf16.msra.mxu0 %v747
  %767 = vmatprep.subr.bf16.mxu0 0
  %768 = vmatpush1.bf16.msra.mxu0 %v748
  %769 = vmatprep.subr.bf16.mxu0 0
  %770 = vmatpush1.bf16.msra.mxu0 %v749
  %771 = vmatprep.subr.bf16.mxu0 0
  %772 = vmatpush1.bf16.msra.mxu0 %v750
  %773 = vmatprep.subr.bf16.mxu0 0
  %774 = vmatpush1.bf16.msra.mxu0 %v751
  %775 = vmatprep.subr.bf16.mxu0 0
  %776 = vmatpush1.bf16.msra.mxu0 %v752
  %777 = vmatprep.subr.bf16.mxu0 0
  %778 = vmatpush1.bf16.msra.mxu0 0
  %779 = vmatprep.subr.bf16.mxu0 0
  %780 = vmatpush1.bf16.msra.mxu0 0
  %781 = vmatprep.subr.bf16.mxu0 0
  %782 = vmatpush1.bf16.msra.mxu0 0
  %783 = vmatprep.subr.bf16.mxu0 0
  %784 = vmatpush1.bf16.msra.mxu0 0
  %785 = vmatprep.subr.bf16.mxu0 0
  %786 = vmatpush1.bf16.msra.mxu0 0
  %787 = vmatprep.subr.bf16.mxu0 0
  %788 = vmatpush1.bf16.msra.mxu0 0
  %789 = vmatprep.subr.bf16.mxu0 0
  %790 = vmatpush1.bf16.msra.mxu0 0
  %791 = vmatprep.subr.bf16.mxu0 0
  %792 = vmatpush1.bf16.msra.mxu0 0
  %793 = vmatprep.mubr.bf16.mxu0 0
  %794 = vmatmul.mubr.bf16.gmra.mrb[0].mxu0 %v690
  %v795 = vpop.f32.mrb[0].mxu0
  %v796 = vadd.f32 %v712, %v795
  %v797 = vpop.f32.mrb[0].mxu0
  %v798 = vpop.f32.mrb[0].mxu0
  %v799 = vpop.f32.mrb[0].mxu0
  %800 = vdwg.mxu0
  %v801 = vmax.f32 %v796, 0.0
  %v802 = vpack.c.bf16 %v801, %v801
  %v803 = vld [vmem:[%s2 + $0x4] sm:$0xf]
  %v804 = vld [vmem:[%s2 + $0xc] sm:$0xf]
  %v805 = vld [vmem:[%s2 + $0x14] sm:$0xf]
  %v806 = vld [vmem:[%s2 + $0x1c] sm:$0xf]
  %v807 = vld [vmem:[%s2 + $0x24] sm:$0xf]
  %v808 = vld [vmem:[%s2 + $0x2c] sm:$0xf]
  %v809 = vld [vmem:[%s2 + $0x34] sm:$0xf]
  %v810 = vld [vmem:[%s2 + $0x3c] sm:$0xf]
  %v811 = vld [vmem:[%s2 + $0x44] sm:$0xf]
  %v812 = vld [vmem:[%s2 + $0x4c] sm:$0xf]
  %v813 = vld [vmem:[%s2 + $0x54] sm:$0xf]
  %v814 = vld [vmem:[%s2 + $0x5c] sm:$0xf]
  %v815 = vld [vmem:[%s2 + $0x64] sm:$0xf]
  %v816 = vld [vmem:[%s2 + $0x6c] sm:$0xf]
  %v817 = vld [vmem:[%s2 + $0x74] sm:$0xf]
  %v818 = vld [vmem:[%s2 + $0x7c] sm:$0xf]
  %v819 = vlaneseq
  %v820 = vshrl.u32 %v819, 7
  %v821 = vsub.s32 0, %v820
  %v822 = vrot.slane %v692, %v821
  %v839 = vunpack.c.l.b16 %v803
  %v840 = vunpack.c.l.b16 %v804
  %v841 = vunpack.c.l.b16 %v805
  %v842 = vunpack.c.l.b16 %v806
  %v843 = vunpack.c.l.b16 %v807
  %v844 = vunpack.c.l.b16 %v808
  %v845 = vunpack.c.l.b16 %v809
  %v846 = vunpack.c.l.b16 %v810
  %v847 = vunpack.c.l.b16 %v811
  %v848 = vunpack.c.l.b16 %v812
  %v849 = vunpack.c.l.b16 %v813
  %v850 = vunpack.c.l.b16 %v814
  %v851 = vunpack.c.l.b16 %v815
  %v852 = vunpack.c.l.b16 %v816
  %v853 = vunpack.c.l.b16 %v817
  %v854 = vunpack.c.l.b16 %v818
  %v855 = vpack.c.b16 %v840, %v839
  %v856 = vpack.c.b16 %v842, %v841
  %v857 = vpack.c.b16 %v844, %v843
  %v858 = vpack.c.b16 %v846, %v845
  %v859 = vpack.c.b16 %v848, %v847
  %v860 = vpack.c.b16 %v850, %v849
  %v861 = vpack.c.b16 %v852, %v851
  %v862 = vpack.c.b16 %v854, %v853
  %871 = vmatprep.subr.bf16.mxu0 0
  %872 = vmatpush1.bf16.msra.mxu0 %v855
  %873 = vmatprep.subr.bf16.mxu0 0
  %874 = vmatpush1.bf16.msra.mxu0 %v856
  %875 = vmatprep.subr.bf16.mxu0 0
  %876 = vmatpush1.bf16.msra.mxu0 %v857
  %877 = vmatprep.subr.bf16.mxu0 0
  %878 = vmatpush1.bf16.msra.mxu0 %v858
  %879 = vmatprep.subr.bf16.mxu0 0
  %880 = vmatpush1.bf16.msra.mxu0 %v859
  %881 = vmatprep.subr.bf16.mxu0 0
  %882 = vmatpush1.bf16.msra.mxu0 %v860
  %883 = vmatprep.subr.bf16.mxu0 0
  %884 = vmatpush1.bf16.msra.mxu0 %v861
  %885 = vmatprep.subr.bf16.mxu0 0
  %886 = vmatpush1.bf16.msra.mxu0 %v862
  %887 = vmatprep.subr.bf16.mxu0 0
  %888 = vmatpush1.bf16.msra.mxu0 0
  %889 = vmatprep.subr.bf16.mxu0 0
  %890 = vmatpush1.bf16.msra.mxu0 0
  %891 = vmatprep.subr.bf16.mxu0 0
  %892 = vmatpush1.bf16.msra.mxu0 0
  %893 = vmatprep.subr.bf16.mxu0 0
  %894 = vmatpush1.bf16.msra.mxu0 0
  %895 = vmatprep.subr.bf16.mxu0 0
  %896 = vmatpush1.bf16.msra.mxu0 0
  %897 = vmatprep.subr.bf16.mxu0 0
  %898 = vmatpush1.bf16.msra.mxu0 0
  %899 = vmatprep.subr.bf16.mxu0 0
  %900 = vmatpush1.bf16.msra.mxu0 0
  %901 = vmatprep.subr.bf16.mxu0 0
  %902 = vmatpush1.bf16.msra.mxu0 0
  %903 = vmatprep.mubr.bf16.mxu0 0
  %904 = vmatmul.mubr.bf16.gmra.mrb[0].mxu0 %v802
  %v905 = vpop.f32.mrb[0].mxu0
  %v906 = vadd.f32 %v822, %v905
  %v907 = vpop.f32.mrb[0].mxu0
  %v908 = vpop.f32.mrb[0].mxu0
  %v909 = vpop.f32.mrb[0].mxu0
  %910 = vdwg.mxu0
  %vm911 = vcmask 64512
  %v912 = vsel %vm911, %v906, 0.0
  %v913 = vsel %vm911, %v685, 0.0
  %914 = vst [vmem:[%s4] sm:$0xff] %v644
  %915 = vst [vmem:[%s4 + $0x8] sm:$0xff] %v683
  %916 = vst [vmem:[%s4 + $0x10] sm:$0xff] %v912
  %917 = vst [vmem:[%s4 + $0x18] sm:$0xff] %v913
  // Predicated region
  $region18: #{teacher_image_model_forward.1} parent=0 // pred_check
    _
  $region19: #{teacher_image_model_forward.1} parent=0 // pred_check_branch
    %919 = sbr.rel (0) target = $region21
  $region20: #{teacher_image_model_forward.1} parent=0 // pred_region
    _
  $region21: #{teacher_image_model_forward.1} parent=0 // pred_fallthru
    _
  // Predicated region
  $region22: #{teacher_image_model_forward.1} parent=0 // pred_check
    _
  $region23: #{teacher_image_model_forward.1} parent=0 // pred_check_branch
    %921 = sbr.rel (0) target = $region25
  $region24: #{teacher_image_model_forward.1} parent=0 // pred_region
    _
  $region25: #{teacher_image_model_forward.1} parent=0 // pred_fallthru
    _

</llo_original>
